<compile_context>
chip_gen: v7x
topology: tpu7x:2x2x1
jax: 0.10.0
libtpu: 0.0.40
codegen_flags: <defaults>
</compile_context>

<pallas_src>
import jax
import jax.numpy as jnp
from jax.experimental import pallas as pl
from jax.experimental.pallas import tpu as pltpu


# ---------------------------------------------------------------------------
# Kernels
# ---------------------------------------------------------------------------
def _add_kernel(x_ref, pe_ref, o_ref):
    # f32 add, cast at the store (free on the VPU; matches torch promotion).
    y = x_ref[...].astype(jnp.float32) + pe_ref[...].astype(jnp.float32)
    o_ref[...] = y.astype(o_ref.dtype)


def _make_dropout_onchip_kernel(threshold: int, inv_keep: float,
                                tile_r: int, tile_c: int):
    """Dropout with on-chip PRNG. `threshold`/`inv_keep` are Python scalars
    (weak-typed literals inside the trace -> no captured-constant error)."""
    gen_r = ((tile_r + 7) // 8) * 8  # generate sublane-aligned rows of bits

    def kernel(seed_ref, x_ref, pe_ref, o_ref):
        j = pl.program_id(0)  # column tile (outer)
        i = pl.program_id(1)  # row tile (inner)
        pltpu.prng_seed(seed_ref[0] + j * pl.num_programs(1) + i)
        bits = pltpu.bitcast(pltpu.prng_random_bits((gen_r, tile_c)), jnp.uint32)
        if gen_r != tile_r:
            bits = bits[:tile_r]
        y = x_ref[...].astype(jnp.float32) + pe_ref[...].astype(jnp.float32)
        keep = bits >= threshold          # unsigned threshold compare
        y = jnp.where(keep, y * inv_keep, 0.0)
        o_ref[...] = y.astype(o_ref.dtype)

    return kernel


def _make_dropout_hostbits_kernel(threshold: int, inv_keep: float):
    """Fallback: random bits streamed in from HBM (works on any backend)."""
    def kernel(x_ref, pe_ref, bits_ref, o_ref):
        y = x_ref[...].astype(jnp.float32) + pe_ref[...].astype(jnp.float32)
        keep = bits_ref[...] >= threshold
        y = jnp.where(keep, y * inv_keep, 0.0)
        o_ref[...] = y.astype(o_ref.dtype)
    return kernel


# ---------------------------------------------------------------------------
# Tiling
# ---------------------------------------------------------------------------
def _tile_sizes(n_rows: int, n_cols: int, itemsize: int,
                target_bytes: int = 2 << 20):
    """Byte-budgeted, lane-dense tiles.

    - Row tile: the full (small) batch, or a sublane-packed multiple.
    - Column tile: grown toward ~2 MiB per buffer (multiple of 128), instead of
      a fixed lane cap, so small-B shapes do not collapse to tiny tiles.
    - Keeps >= 2 grid steps on the column axis when possible (v7x megacore).
    """
    sublane = max(8, 32 // itemsize)  # 8 f32, 16 bf16, 32 int8/fp8

    if n_rows <= 4 * sublane:
        tile_r = n_rows                # full extent is always legal
    else:
        tile_r = 4 * sublane

    if n_cols % 128 != 0:
        tile_c = n_cols                # full extent is always legal
    else:
        want = max(128, target_bytes // max(1, tile_r * itemsize))
        tile_c = max(128, min(n_cols, (want // 128) * 128))

    def cdiv(a, b):
        return -(-a // b)

    if (cdiv(n_rows, tile_r) == 1 and cdiv(n_cols, tile_c) == 1
            and n_cols % 256 == 0 and n_cols >= 256):
        tile_c = n_cols // 2           # guarantee a 2-step "parallel" axis

    return tile_r, tile_c


# ---------------------------------------------------------------------------
# Wrapper
# ---------------------------------------------------------------------------
def learnable_positional_encoding(x, pe, *, key=None, p=0.1, training=False,
                                  force_host_bits=False):
    """Pallas forward of LearnablePositionalEncoding.

    x:  [B, S, D]   activations
    pe: [S, D]      learnable positional encoding (max_len == S)
    """
    B, S, D = x.shape
    assert pe.shape == (S, D), "pe must broadcast against x exactly like torch"
    C = S * D

    # Lane-dense flattened views; pe broadcasts over the batch (row) axis.
    x2 = x.reshape(B, C)
    pe2 = pe.reshape(1, C)  # keep native dtype; the add happens in f32 in-kernel

    itemsize = jnp.dtype(x.dtype).itemsize
    tile_r, tile_c = _tile_sizes(B, C, itemsize)
    n_row = pl.cdiv(B, tile_r)
    n_col = pl.cdiv(C, tile_c)
    # Column axis OUTER / row axis INNER: the pe block index depends only on
    # the column tile, so it is not re-DMAed on every grid step.
    grid = (n_col, n_row)

    out_shape = jax.ShapeDtypeStruct((B, C), x.dtype)
    compiler_params = pltpu.CompilerParams(
        dimension_semantics=("parallel", "parallel"),
        vmem_limit_bytes=32 << 20,  # above v5e's 16 MiB scoped-VMEM default
    )

    use_dropout = bool(training) and float(p) > 0.0
    if not use_dropout:
        x_spec = pl.BlockSpec((tile_r, tile_c), lambda j, i: (i, j))
        pe_spec = pl.BlockSpec((1, tile_c), lambda j, i: (0, j))
        out = pl.pallas_call(
            _add_kernel,
            out_shape=out_shape,
            grid=grid,
            in_specs=[x_spec, pe_spec],
            out_specs=x_spec,
            compiler_params=compiler_params,
        )(x2, pe2)
        return out.reshape(B, S, D)

    assert key is not None, "training dropout needs a PRNG key"
    assert 0.0 < float(p) < 1.0, "dropout p must be in (0, 1) when training"
    threshold = min(int(round(float(p) * (1 << 32))), (1 << 32) - 1)
    inv_keep = 1.0 / (1.0 - float(p))

    def _host_bits_call():
        bits = jax.random.bits(key, (B, C), dtype=jnp.uint32)
        x_spec = pl.BlockSpec((tile_r, tile_c), lambda j, i: (i, j))
        pe_spec = pl.BlockSpec((1, tile_c), lambda j, i: (0, j))
        return pl.pallas_call(
            _make_dropout_hostbits_kernel(threshold, inv_keep),
            out_shape=out_shape,
            grid=grid,
            in_specs=[x_spec, pe_spec, x_spec],  # bits tiled exactly like x
            out_specs=x_spec,
            compiler_params=compiler_params,
        )(x2, pe2, bits)

    def _onchip_call():
        seed = jax.random.randint(key, (1,), 0, jnp.iinfo(jnp.int32).max,
                                  dtype=jnp.int32)
        x_spec = pl.BlockSpec((tile_r, tile_c), lambda j, i, seed_ref: (i, j))
        pe_spec = pl.BlockSpec((1, tile_c), lambda j, i, seed_ref: (0, j))
        grid_spec = pltpu.PrefetchScalarGridSpec(
            num_scalar_prefetch=1,
            grid=grid,
            in_specs=[x_spec, pe_spec],
            out_specs=x_spec,
        )
        return pl.pallas_call(
            _make_dropout_onchip_kernel(threshold, inv_keep, tile_r, tile_c),
            out_shape=out_shape,
            grid_spec=grid_spec,
            compiler_params=compiler_params,
        )(seed, x2, pe2)

    # On-chip PRNG only lowers on a real TPU backend; fall back to the
    # host-bits kernel under CPU / interpret harnesses.
    if force_host_bits or jax.default_backend() != "tpu":
        out = _host_bits_call()
    else:
        try:
            out = _onchip_call()
        except Exception:  # e.g. TPU interpret mode without PRNG lowering
            out = _host_bits_call()
    return out.reshape(B, S, D)


# ---------------------------------------------------------------------------
# Self-test
# ---------------------------------------------------------------------------
if __name__ == "__main__":
    B, S, D = 8, 16, 32  # batch, seq (== max_len), d_model
    key = jax.random.PRNGKey(0)
    k_pe, k_x, k_drop = jax.random.split(key, 3)

    # nn.init.uniform_(self.pe, -0.02, 0.02) -- deterministic synthetic init
    pe = jax.random.uniform(k_pe, (S, D), jnp.float32, minval=-0.02, maxval=0.02)
    x = jax.random.normal(k_x, (B, S, D), dtype=jnp.float32)
    ref = x + pe[None, :, :]

    # eval mode: dropout is identity -> must match x + pe exactly
    y_eval = jax.block_until_ready(
        learnable_positional_encoding(x, pe, p=0.1, training=False))
    assert y_eval.shape == x.shape
    assert jnp.allclose(y_eval, ref, atol=1e-6), "eval-mode mismatch vs reference"

    # training mode (auto path: on-chip PRNG on TPU, host bits elsewhere)
    p = 0.1
    scaled_ref = ref / (1.0 - p)
    y_train = jax.block_until_ready(
        learnable_positional_encoding(x, pe, key=k_drop, p=p, training=True))
    assert y_train.shape == x.shape
    ok = jnp.isclose(y_train, scaled_ref, rtol=1e-5, atol=1e-5) | (y_train == 0.0)
    assert bool(jnp.all(ok)), "training-mode dropout scaling mismatch"
    assert bool(jnp.any(y_train == 0.0)) and bool(jnp.any(y_train != 0.0)), \
        "dropout mask degenerate"

    # host-bits fallback path (runs on every backend) -- exercised explicitly
    y_hb = jax.block_until_ready(
        learnable_positional_encoding(x, pe, key=k_drop, p=p, training=True,
                                      force_host_bits=True))
    ok = jnp.isclose(y_hb, scaled_ref, rtol=1e-5, atol=1e-5) | (y_hb == 0.0)
    assert bool(jnp.all(ok)), "host-bits dropout scaling mismatch"

    print("KERNEL_OK")
</pallas_src>

<mosaic_0001>
module attributes {stable_mosaic.version = 11 : i64} {
  func.func @_add_kernel(%arg0: i32, %arg1: i32, %arg2: memref<8x256xf32, #tpu.memory_space<vmem>>, %arg3: memref<1x256xf32, #tpu.memory_space<vmem>>, %arg4: memref<8x256xf32, #tpu.memory_space<vmem>>) attributes {dimension_semantics = [#tpu.dimension_semantics<parallel>, #tpu.dimension_semantics<parallel>], iteration_bounds = array<i64: 2, 1>, scalar_prefetch = 0 : i64, scratch_operands = 0 : i64, tpu.core_type = #tpu.core_type<tc>, window_params = [{transform_indices = @transform_0, window_bounds = array<i64: 8, 256>}, {transform_indices = @transform_1, window_bounds = array<i64: 1, 256>}, {transform_indices = @transform_2, window_bounds = array<i64: 8, 256>}]} {
    %c0 = arith.constant 0 : index
    %c0_0 = arith.constant 0 : index
    %0 = vector.load %arg2[%c0, %c0_0] : memref<8x256xf32, #tpu.memory_space<vmem>>, vector<8x256xf32>
    %c0_1 = arith.constant 0 : index
    %c0_2 = arith.constant 0 : index
    %1 = vector.load %arg3[%c0_1, %c0_2] : memref<1x256xf32, #tpu.memory_space<vmem>>, vector<1x256xf32>
    %2 = vector.broadcast %1 : vector<1x256xf32> to vector<8x256xf32>
    %3 = arith.addf %0, %2 : vector<8x256xf32>
    %c0_3 = arith.constant 0 : index
    %c0_4 = arith.constant 0 : index
    %4 = vector.load %arg4[%c0_3, %c0_4] : memref<8x256xf32, #tpu.memory_space<vmem>>, vector<8x256xf32>
    tpu.vector_store %arg4[%c0_3, %c0_4], %3 {strides = array<i32>} : memref<8x256xf32, #tpu.memory_space<vmem>>, vector<8x256xf32>,
    return
  }
  func.func @transform_0(%arg0: i32, %arg1: i32) -> (i32, i32) {
    %c0_i32 = arith.constant 0 : i32
    return %arg1, %arg0 : i32, i32
  }
  func.func @transform_1(%arg0: i32, %arg1: i32) -> (i32, i32) {
    %c0_i32 = arith.constant 0 : i32
    %c0_i32_0 = arith.constant 0 : i32
    return %c0_i32, %arg0 : i32, i32
  }
  func.func @transform_2(%arg0: i32, %arg1: i32) -> (i32, i32) {
    %c0_i32 = arith.constant 0 : i32
    return %arg1, %arg0 : i32, i32
  }
}

</mosaic_0001>

<llo_original>
// kernel: tpu_custom_call.1
$region0: #{tpu_custom_call.1}
  #allocation0 [shape = 'u32[]', space=smem, size = 0x4, offset = 0x4, fixed_abs, tag = 'smem constant byte address 0x4 - core index']
  #allocation1 [shape = 'u32[144,128]{1,0:T(1,128)}', space=vmem, size = 0x12000, scoped, tag = 'internal scratch']
  %s0 = inlined_call_operand.hbm [shape: f32[8,512], index: 0, kind: input, shape index: {}]
  %s1 = inlined_call_operand.hbm [shape: f32[1,512], index: 1, kind: input, shape index: {}]
  %s2 = inlined_call_operand.hbm [shape: f32[8,512], index: 2, kind: output, shape index: {}]
  %s3 = sld [smem:[#allocation0]]
  $region49: #{tpu_custom_call.1} parent=0
    _
  %s5 = ssub.s32 1, %s3
  %s6 = scalar_select 0, %s5, %s3
  $region1: #{tpu_custom_call.1} parent=0
    #allocation2 [shape = 'u8[16384]{0}', space=vmem, size = 0x4000, scoped, tag = 'input window, operand 0']
    #allocation3 [shape = 's32[2]{0}', space=sflag, size = 0x8, scoped, tag = 'scoped memory for tpu_custom_call.1']
    #allocation4 [shape = 's32[2]{0}', space=sflag, size = 0x8, scoped, tag = 'scoped memory for tpu_custom_call.1']
    #allocation5 [shape = 'u8[2048]{0}', space=vmem, size = 0x800, scoped, tag = 'input window, operand 1']
    #allocation6 [shape = 's32[2]{0}', space=sflag, size = 0x8, scoped, tag = 'scoped memory for tpu_custom_call.1']
    #allocation7 [shape = 'u8[16384]{0}', space=vmem, size = 0x4000, scoped, tag = 'output window, operand 0']
    %7 = vsyncpa [#allocation3], 0
    %s8 = scalar_lea.sflag [#allocation3], 1
    %9 = vsyncpa %s8, 0
    %10 = vsyncpa [#allocation6], 0
    %s11 = scalar_lea.sflag [#allocation6], 1
    %12 = vsyncpa %s11, 0
    %13 = vsyncpa [#allocation4], 0
    %s14 = scalar_lea.sflag [#allocation4], 1
    %15 = vsyncpa %s14, 0
    loop: start=0, step=1, limit=4
    $region2: #{tpu_custom_call.1} parent=1 // loop_pre_header
      _
    $region3: #{tpu_custom_call.1} parent=1 // loop_header
      %s17 = sphi 0, %s21
      %p18 = scmp.ge.s32.totalorder %s17, 4
      %s24 = sphi 0, %s36
      %s25 = sphi 0, %s32
      %s26 = sphi 0, %s24
      %s27 = sphi 0, %s25
      %s28 = sphi 0, %s26
      %s29 = sphi 0, %s27
      %s41 = sphi 0, %s43
      %s44 = sphi 0, %s41
      %s45 = sphi 0, %s44
      %s61 = sphi 0, %s45
      %s67 = sphi 0, %s69
      %s70 = sphi 0, %s67
      %s71 = sphi 0, %s70
      %s87 = sphi 0, %s71
      %s95 = sphi 0, %s97
      %s98 = sphi 0, %s95
      %s99 = sphi 0, %s98
      %s115 = sphi 0, %s99
    $region4: #{tpu_custom_call.1} parent=1 // loop_header_branch
      %20 = sbr.rel (%p18) target = $region8
    $region5: #{tpu_custom_call.1} parent=1 // loop_body
      %s22 = ssub.s32 %s17, 1
      %s23 = ssub.s32 %s17, 2
      %s30 = sadd.s32 1, %s25
      %p31 = scmp.ge.s32.totalorder %s30, 1
      %s32 = scalar_select %p31, 0, %s30
      %s33 = sadd.s32 1, %s24
      %s34 = scalar_select %p31, %s33, %s24
      %p35 = scmp.ge.s32.totalorder %s34, 2
      %s36 = scalar_select %p35, 0, %s34
      %s37 = ssub.s32 %s25, %s32
      %s38 = ssub.s32 %s24, %s36
      %s39 = sor.u32 %s37, %s38
      %p40 = scmp.eq.s32.totalorder %s39, 0
      %s42 = sadd.s32 %s41, 1
      %s43 = scalar_select %p40, %s41, %s42
      %p46 = pneg %p40
      %p47 = scmp.eq.s32.totalorder %s17, 1
      %p48 = por %p46, %p47
      %p49 = scmp.ne.s32.totalorder %s41, %s44
      %p50 = scmp.eq.s32.totalorder %s17, 0
      %p51 = por %p49, %p50
      %p52 = scmp.ne.s32.totalorder %s41, %s44
      %p53 = scmp.eq.s32.totalorder %s22, 1
      %p54 = por %p52, %p53
      %p55 = scmp.ne.s32.totalorder %s44, %s45
      %p56 = scmp.eq.s32.totalorder %s22, 0
      %p57 = por %p55, %p56
      %p58 = scmp.ne.s32.totalorder %s44, %s45
      %p59 = scmp.eq.s32.totalorder %s23, 1
      %p60 = por %p58, %p59
      %p62 = scmp.ne.s32.totalorder %s45, %s61
      %p63 = scmp.eq.s32.totalorder %s23, 0
      %p64 = por %p62, %p63
      %s65 = ssub.s32 %s24, %s36
      %p66 = scmp.eq.s32.totalorder %s65, 0
      %s68 = sadd.s32 %s67, 1
      %s69 = scalar_select %p66, %s67, %s68
      %p72 = pneg %p66
      %p73 = scmp.eq.s32.totalorder %s17, 1
      %p74 = por %p72, %p73
      %p75 = scmp.ne.s32.totalorder %s67, %s70
      %p76 = scmp.eq.s32.totalorder %s17, 0
      %p77 = por %p75, %p76
      %p78 = scmp.ne.s32.totalorder %s67, %s70
      %p79 = scmp.eq.s32.totalorder %s22, 1
      %p80 = por %p78, %p79
      %p81 = scmp.ne.s32.totalorder %s70, %s71
      %p82 = scmp.eq.s32.totalorder %s22, 0
      %p83 = por %p81, %p82
      %p84 = scmp.ne.s32.totalorder %s70, %s71
      %p85 = scmp.eq.s32.totalorder %s23, 1
      %p86 = por %p84, %p85
      %p88 = scmp.ne.s32.totalorder %s71, %s87
      %p89 = scmp.eq.s32.totalorder %s23, 0
      %p90 = por %p88, %p89
      %s91 = ssub.s32 %s25, %s32
      %s92 = ssub.s32 %s24, %s36
      %s93 = sor.u32 %s91, %s92
      %p94 = scmp.eq.s32.totalorder %s93, 0
      %s96 = sadd.s32 %s95, 1
      %s97 = scalar_select %p94, %s95, %s96
      %p100 = pneg %p94
      %p101 = scmp.eq.s32.totalorder %s17, 1
      %p102 = por %p100, %p101
      %p103 = scmp.ne.s32.totalorder %s95, %s98
      %p104 = scmp.eq.s32.totalorder %s17, 0
      %p105 = por %p103, %p104
      %p106 = scmp.ne.s32.totalorder %s95, %s98
      %p107 = scmp.eq.s32.totalorder %s22, 1
      %p108 = por %p106, %p107
      %p109 = scmp.ne.s32.totalorder %s98, %s99
      %p110 = scmp.eq.s32.totalorder %s22, 0
      %p111 = por %p109, %p110
      %p112 = scmp.ne.s32.totalorder %s98, %s99
      %p113 = scmp.eq.s32.totalorder %s23, 1
      %p114 = por %p112, %p113
      %p116 = scmp.ne.s32.totalorder %s99, %s115
      %p117 = scmp.eq.s32.totalorder %s23, 0
      %p118 = por %p116, %p117
      %p119 = scmp.le.s32.totalorder 1, %s17
      %p120 = scmp.lt.s32.totalorder %s17, 3
      %p121 = pnand %p119, %p120
      %p122 = pneg %p121
      // Predicated region
      $region9: #{tpu_custom_call.1} parent=5 // pred_check
        _
      $region10: #{tpu_custom_call.1} parent=5 // pred_check_branch
        %124 = sbr.rel (%p121) target = $region12
      $region11: #{tpu_custom_call.1} parent=5 // pred_region
        %s125 = ssub.s32 %s17, 1
      $region12: #{tpu_custom_call.1} parent=5 // pred_fallthru
        _
      %p126 = scmp.lt.s32.totalorder %s17, 2
      // Predicated region
      $region13: #{tpu_custom_call.1} parent=5 // pred_check
        %p127 = pneg %p126
      $region14: #{tpu_custom_call.1} parent=5 // pred_check_branch
        %129 = sbr.rel (%p127) target = $region16
      $region15: #{tpu_custom_call.1} parent=5 // pred_region
        // Predicated region
        $region17: #{tpu_custom_call.1} parent=15 // pred_check
          %p130 = pneg %p51
        $region18: #{tpu_custom_call.1} parent=15 // pred_check_branch
          %132 = sbr.rel (%p130) target = $region20
        $region19: #{tpu_custom_call.1} parent=15 // pred_region
          %s133 = sand.u32 %s41, 1
          %s134 = scalar_lea.sflag [#allocation3], %s133
          %s135 = sand.u32 %s41, 1
          %s136 = smul.addr %s135, 16
          %s137 = scalar_lea.vmem [#allocation2], %s136
          %s138 = smul.u32 2, %s24
          %s140 = ssub.s32 256, 256
          %141 = vsyncadd %s134, %s140
          %s142 = smul.addr %s25, 4
          %s143 = sadd.s32 %s138, %s142
          %s144 = smul.addr %s143, 128
          %s145 = scalar_lea.hbm %s0, %s144
          %s147 = sshll.u32 %s137, 4
          %s148 = int_to_ptr.vmem [resolvable:$true] %s147
          %150 = dma.hbm_to_vmem [thread:$0]  %s145, 256, %s148, %s134
        $region20: #{tpu_custom_call.1} parent=15 // pred_fallthru
          _
        // Predicated region
        $region21: #{tpu_custom_call.1} parent=15 // pred_check
          %p151 = pneg %p77
        $region22: #{tpu_custom_call.1} parent=15 // pred_check_branch
          %153 = sbr.rel (%p151) target = $region24
        $region23: #{tpu_custom_call.1} parent=15 // pred_region
          %s154 = sand.u32 %s67, 1
          %s155 = scalar_lea.sflag [#allocation6], %s154
          %s156 = sand.u32 %s67, 1
          %s157 = smul.addr %s156, 2
          %s158 = scalar_lea.vmem [#allocation5], %s157
          %s159 = smul.u32 2, %s24
          %s161 = ssub.s32 32, 32
          %162 = vsyncadd %s155, %s161
          %s163 = smul.addr %s159, 16
          %s164 = scalar_lea.hbm %s1, %s163
          %s166 = sshll.u32 %s158, 4
          %s167 = int_to_ptr.vmem [resolvable:$true] %s166
          %169 = dma.hbm_to_vmem [thread:$0]  %s164, 32, %s167, %s155
        $region24: #{tpu_custom_call.1} parent=15 // pred_fallthru
          _
      $region16: #{tpu_custom_call.1} parent=5 // pred_fallthru
        _
      %p170 = scmp.le.s32.totalorder 1, %s17
      %p171 = scmp.lt.s32.totalorder %s17, 3
      %p172 = pnand %p170, %p171
      %p173 = pneg %p172
      // Predicated region
      $region25: #{tpu_custom_call.1} parent=5 // pred_check
        _
      $region26: #{tpu_custom_call.1} parent=5 // pred_check_branch
        %175 = sbr.rel (%p172) target = $region28
      $region27: #{tpu_custom_call.1} parent=5 // pred_region
        %s176 = ssub.s32 %s17, 1
        %s177 = sand.u32 %s44, 1
        %s178 = scalar_lea.sflag [#allocation3], %s177
        %s179 = sand.u32 %s44, 1
        %s180 = smul.addr %s179, 16
        %s181 = scalar_lea.vmem [#allocation2], %s180
        // Predicated region
        $region29: #{tpu_custom_call.1} parent=27 // pred_check
          %p182 = pneg %p57
        $region30: #{tpu_custom_call.1} parent=27 // pred_check_branch
          %184 = sbr.rel (%p182) target = $region32
        $region31: #{tpu_custom_call.1} parent=27 // pred_region
          %185 = dma.done %s178, 256
        $region32: #{tpu_custom_call.1} parent=27 // pred_fallthru
          _
        %s186 = sand.u32 %s70, 1
        %s187 = scalar_lea.sflag [#allocation6], %s186
        %s188 = sand.u32 %s70, 1
        %s189 = smul.addr %s188, 2
        %s190 = scalar_lea.vmem [#allocation5], %s189
        // Predicated region
        $region33: #{tpu_custom_call.1} parent=27 // pred_check
          %p191 = pneg %p83
        $region34: #{tpu_custom_call.1} parent=27 // pred_check_branch
          %193 = sbr.rel (%p191) target = $region36
        $region35: #{tpu_custom_call.1} parent=27 // pred_region
          %194 = dma.done %s187, 32
        $region36: #{tpu_custom_call.1} parent=27 // pred_fallthru
          _
        %s195 = sand.u32 %s44, 1
        %s196 = scalar_lea.sflag [#allocation3], %s195
        %s197 = sand.u32 %s44, 1
        %s198 = smul.addr %s197, 16
        %s199 = scalar_lea.vmem [#allocation2], %s198
        %p200 = pneg %p57
        %p201 = pneg %p54
        %s202 = sand.u32 %s70, 1
        %s203 = scalar_lea.sflag [#allocation6], %s202
        %s204 = sand.u32 %s70, 1
        %s205 = smul.addr %s204, 2
        %s206 = scalar_lea.vmem [#allocation5], %s205
        %p207 = pneg %p83
        %p208 = pneg %p80
        %p209 = pneg %p111
        %p210 = pneg %p108
        %s211 = sand.u32 %s98, 1
        %s212 = scalar_lea.sflag [#allocation4], %s211
        %s213 = sand.u32 %s98, 1
        %s214 = smul.addr %s213, 16
        %s215 = scalar_lea.vmem [#allocation7], %s214
        %s216 = smul.u32 2, %s26
        %s217 = smul.u32 2, %s26
        %s218 = smul.u32 2, %s26
        %v219 = vld [vmem:[%s181] sm:$0xff]
        %v220 = vld [vmem:[%s181 + $0x8] sm:$0xff]
        %v221 = vld [vmem:[%s190] sm:$0x3]
        %v223 = vlaneseq
        %v224 = vshrl.u32 %v223, 7
        %v225 = vsub.s32 0, %v224
        %v226 = vrot.slane %v221, %v225
        %v227 = vlaneseq
        %v228 = vshrl.u32 %v227, 7
        %v229 = vsub.s32 1, %v228
        %v230 = vrot.slane %v221, %v229
        %v233 = vadd.f32 %v219, %v226
        %v234 = vadd.f32 %v220, %v230
        %235 = vst [vmem:[%s215] sm:$0xff] %v233
        %236 = vst [vmem:[%s215 + $0x8] sm:$0xff] %v234
        %s237 = sand.u32 %s98, 1
        %s238 = scalar_lea.sflag [#allocation4], %s237
        %s239 = sand.u32 %s98, 1
        %s240 = smul.addr %s239, 16
        %s241 = scalar_lea.vmem [#allocation7], %s240
        // Predicated region
        $region37: #{tpu_custom_call.1} parent=27 // pred_check
          %p242 = pneg %p108
        $region38: #{tpu_custom_call.1} parent=27 // pred_check_branch
          %244 = sbr.rel (%p242) target = $region40
        $region39: #{tpu_custom_call.1} parent=27 // pred_region
          %s245 = smul.u32 2, %s26
          %s247 = ssub.s32 256, 256
          %248 = vsyncadd %s238, %s247
          %s249 = smul.addr %s27, 4
          %s250 = sadd.s32 %s245, %s249
          %s251 = smul.addr %s250, 128
          %s252 = scalar_lea.hbm %s2, %s251
          %s254 = sshll.u32 %s241, 4
          %s255 = int_to_ptr.vmem [resolvable:$true] %s254
          %257 = dma.vmem_to_hbm [thread:$0]  %s255, 256, %s252, %s238
        $region40: #{tpu_custom_call.1} parent=27 // pred_fallthru
          _
      $region28: #{tpu_custom_call.1} parent=5 // pred_fallthru
        _
      %p258 = scmp.le.s32.totalorder 2, %s17
      // Predicated region
      $region41: #{tpu_custom_call.1} parent=5 // pred_check
        %p259 = pneg %p258
      $region42: #{tpu_custom_call.1} parent=5 // pred_check_branch
        %261 = sbr.rel (%p259) target = $region44
      $region43: #{tpu_custom_call.1} parent=5 // pred_region
        %s262 = ssub.s32 %s17, 2
        // Predicated region
        $region45: #{tpu_custom_call.1} parent=43 // pred_check
          %p263 = pneg %p114
        $region46: #{tpu_custom_call.1} parent=43 // pred_check_branch
          %265 = sbr.rel (%p263) target = $region48
        $region47: #{tpu_custom_call.1} parent=43 // pred_region
          %s266 = sand.u32 %s99, 1
          %s267 = scalar_lea.sflag [#allocation4], %s266
          %s268 = sand.u32 %s99, 1
          %s269 = smul.addr %s268, 16
          %s270 = scalar_lea.vmem [#allocation7], %s269
          %271 = dma.done %s267, 256
        $region48: #{tpu_custom_call.1} parent=43 // pred_fallthru
          _
      $region44: #{tpu_custom_call.1} parent=5 // pred_fallthru
        _
    $region6: #{tpu_custom_call.1} parent=1 // loop_footer
      %s21 = sadd.s32 1, %s17
    $region7: #{tpu_custom_call.1} parent=1 // loop_footer_branch
      %16 = sbr.rel target = $region3
    $region8: #{tpu_custom_call.1} parent=1 // loop_exit
      _
    %272 = vsyncpa [#allocation3], 1
    %s273 = scalar_lea.sflag [#allocation3], 1
    %274 = vsyncpa %s273, 1
    %275 = vsyncpa [#allocation6], 1
    %s276 = scalar_lea.sflag [#allocation6], 1
    %277 = vsyncpa %s276, 1
    %278 = vsyncpa [#allocation4], 1
    %s279 = scalar_lea.sflag [#allocation4], 1
    %280 = vsyncpa %s279, 1

</llo_original>
